<compile_context>
chip_gen: v6e
topology: v6e:2x2x1
jax: 0.10.0
libtpu: 0.0.40
codegen_flags: <defaults>
</compile_context>

<pallas_src>
import functools

import numpy as np

import jax
import jax.numpy as jnp
from jax.experimental import pallas as pl
from jax.experimental.pallas import tpu as pltpu

EPS = 1e-5


# ----------------------------------------------------------------------------
# pltpu.roll rotation-direction probe (run once, eagerly, outside jit)
# ----------------------------------------------------------------------------
@functools.lru_cache(maxsize=None)
def _roll_matches_numpy() -> bool:
    """Pin down pltpu.roll's rotation direction with a tiny eager kernel so the
    conv tap shifts below are correct regardless of convention."""

    def kern(x_ref, o_ref):
        o_ref[...] = pltpu.roll(x_ref[...], 1, 1)

    x = jnp.tile(jnp.arange(128, dtype=jnp.float32)[None, :], (8, 1))
    out = pl.pallas_call(
        kern, out_shape=jax.ShapeDtypeStruct((8, 128), jnp.float32))(x)
    # numpy convention (out[i] = in[i - shift]): output lane 1 holds input 0.
    return bool(out[0, 1] == 0.0)


def _lane_shift(a, off, roll_np):
    """Return s with s[:, i] == a[:, (i + off) % L]  (L = a.shape[-1])."""
    if off == 0:
        return a
    L = a.shape[-1]
    shift = (-off) % L if roll_np else off % L
    return pltpu.roll(a, shift, 1)


# ----------------------------------------------------------------------------
# In-kernel im2col helper: write the k*k shifted+masked taps of a (C, H*W)
# activation into a (k*k*C, H*W) f32 VMEM scratch.  Each tap = lane rotation
# + 0/1 boundary mask (zero padding); the centre tap needs neither.  The
# caller then performs a single MXU matmul against a (Co, k*k*C) weight.
# ----------------------------------------------------------------------------
def _write_taps(taps_ref, a, masks, *, k, p, W, roll_np):
    C = a.shape[0]
    for idx in range(k * k):
        dy, dx = idx // k, idx % k
        off = (dy - p) * W + (dx - p)          # flat input offset of this tap
        if dy == p and dx == p:
            tap = a                            # centre tap: mask is all-ones
        else:
            tap = _lane_shift(a, off, roll_np) * masks[idx:idx + 1]
        taps_ref[pl.ds(idx * C, C), :] = tap


# ----------------------------------------------------------------------------
# Fused kernels
# ----------------------------------------------------------------------------
def _make_stage1_kernel(*, k, p, W, compute_dtype, roll_np):
    """relu(bn1(x)) -> conv1 (single matmul) + bn2 partial statistics.

    h is stored to HBM in `compute_dtype` (bf16); the bn2 sum / sum-of-squares
    are taken from the f32 accumulator so statistic precision is unaffected.
    """

    def kernel(x_ref, s1_ref, b1_ref, w1_ref, m_ref,
               h_ref, ssum_ref, ssq_ref, taps_ref):
        a1 = jnp.maximum(x_ref[0] * s1_ref[...] + b1_ref[...], 0.0)  # (Cin,HW)
        _write_taps(taps_ref, a1, m_ref[...], k=k, p=p, W=W, roll_np=roll_np)
        h = jnp.dot(w1_ref[...], taps_ref[...].astype(compute_dtype),
                    preferred_element_type=jnp.float32)              # (Cmid,HW)
        # per-image per-channel sum / sum-of-squares -> bn2's batch statistics
        # are derived without re-reading h from HBM.
        ssum_ref[0] = jnp.sum(h, axis=1, keepdims=True)
        ssq_ref[0] = jnp.sum(h * h, axis=1, keepdims=True)
        h_ref[0] = h.astype(h_ref.dtype)

    return kernel


def _make_stage2_kernel(*, k, p, W, compute_dtype, roll_np, has_shortcut):
    """relu(bn2(h)) -> conv2 (single matmul) + residual add.

    For the not-equalInOut branch the 1x1 shortcut is recomputed here from x
    (relu(bn1(x)) + tiny matmul) instead of round-tripping it through HBM.
    """

    def kernel(h_ref, s2_ref, b2_ref, w2_ref, m_ref, x_ref, *rest):
        if has_shortcut:
            s1_ref, b1_ref, wsc_ref, o_ref, taps_ref = rest
        else:
            o_ref, taps_ref = rest

        a2 = jnp.maximum(
            h_ref[0].astype(jnp.float32) * s2_ref[...] + b2_ref[...], 0.0)
        _write_taps(taps_ref, a2, m_ref[...], k=k, p=p, W=W, roll_np=roll_np)
        y = jnp.dot(w2_ref[...], taps_ref[...].astype(compute_dtype),
                    preferred_element_type=jnp.float32)              # (Cout,HW)

        if has_shortcut:
            a1 = jnp.maximum(x_ref[0] * s1_ref[...] + b1_ref[...], 0.0)
            res = jnp.dot(wsc_ref[...], a1.astype(compute_dtype),
                          preferred_element_type=jnp.float32)
        else:
            res = x_ref[0]
        o_ref[0] = y + res

    return kernel


# ----------------------------------------------------------------------------
# Wrapper helpers
# ----------------------------------------------------------------------------
def _tap_masks(H, W, k, p):
    """0/1 mask per tap marking in-image source pixels (zero padding)."""
    y = np.arange(H)[:, None]
    x = np.arange(W)[None, :]
    ms = []
    for idx in range(k * k):
        dy, dx = idx // k, idx % k
        yy, xx = y + (dy - p), x + (dx - p)
        ms.append(((yy >= 0) & (yy < H) & (xx >= 0) & (xx < W)).reshape(H * W))
    return np.stack(ms, axis=0).astype(np.float32)          # (k*k, H*W)


def _fold_bn(gamma, beta, mean, var):
    scale = gamma / jnp.sqrt(var + EPS)
    shift = beta - mean * scale
    return (scale.astype(jnp.float32).reshape(-1, 1),
            shift.astype(jnp.float32).reshape(-1, 1))


def _conv_weight_2d(w, compute_dtype):
    """(Co, Ci, k, k) -> (Co, k*k*Ci) matching the in-kernel tap stacking."""
    co, ci, kh, kw = w.shape
    return jnp.transpose(w, (0, 2, 3, 1)).reshape(co, kh * kw * ci).astype(
        compute_dtype)


# ----------------------------------------------------------------------------
# Block forward (Pallas)
# ----------------------------------------------------------------------------
@functools.partial(jax.jit, static_argnums=(2, 3, 4, 5))
def _block_forward_impl(x_nchw, params, k, p, compute_dtype, roll_np):
    N, Cin, H, W = x_nchw.shape
    HW = H * W
    kk = k * k
    Cmid = params["conv1_w"].shape[0]
    Cout = params["conv2_w"].shape[0]
    equal = Cin == Cout
    assert 2 * p == k - 1, "only 'same' padding (2p == k-1), stride 1 supported"

    x = x_nchw.reshape(N, Cin, HW).astype(jnp.float32)       # lane dim = H*W

    # bn1 training-mode batch statistics: single fused pass (sum + sum-of-sq).
    cnt1 = float(N * HW)
    m1 = jnp.sum(x, axis=(0, 2)) / cnt1
    v1 = jnp.maximum(jnp.sum(x * x, axis=(0, 2)) / cnt1 - m1 * m1, 0.0)
    s1, b1 = _fold_bn(params["bn1_gamma"], params["bn1_beta"], m1, v1)

    masks = jnp.asarray(_tap_masks(H, W, k, p))              # compile-time const
    w1 = _conv_weight_2d(params["conv1_w"], compute_dtype)   # (Cmid, kk*Cin)
    w2 = _conv_weight_2d(params["conv2_w"], compute_dtype)   # (Cout, kk*Cmid)

    x_spec = pl.BlockSpec((1, Cin, HW), lambda n: (n, 0, 0))
    h_spec = pl.BlockSpec((1, Cmid, HW), lambda n: (n, 0, 0))
    o_spec = pl.BlockSpec((1, Cout, HW), lambda n: (n, 0, 0))
    st_spec = pl.BlockSpec((1, Cmid, 1), lambda n: (n, 0, 0))
    m_spec = pl.BlockSpec((kk, HW), lambda n: (0, 0))
    w1_spec = pl.BlockSpec((Cmid, kk * Cin), lambda n: (0, 0))
    w2_spec = pl.BlockSpec((Cout, kk * Cmid), lambda n: (0, 0))

    def vec_spec(c):
        return pl.BlockSpec((c, 1), lambda n: (0, 0))

    cparams = pltpu.CompilerParams(
        dimension_semantics=("parallel",),
        vmem_limit_bytes=32 * 1024 * 1024)
    # TODO(synk): for real WideResNet widths / small batch, add a second grid
    # axis (spatial row blocks with halo, or output-channel tiles) so each
    # TensorCore gets >=8 pipeline steps instead of grid=(N,).

    stage1 = _make_stage1_kernel(k=k, p=p, W=W, compute_dtype=compute_dtype,
                                 roll_np=roll_np)
    h, ssum, ssq = pl.pallas_call(
        stage1,
        grid=(N,),
        in_specs=[x_spec, vec_spec(Cin), vec_spec(Cin), w1_spec, m_spec],
        out_specs=(h_spec, st_spec, st_spec),
        out_shape=(jax.ShapeDtypeStruct((N, Cmid, HW), compute_dtype),  # bf16 h
                   jax.ShapeDtypeStruct((N, Cmid, 1), jnp.float32),
                   jax.ShapeDtypeStruct((N, Cmid, 1), jnp.float32)),
        scratch_shapes=[pltpu.VMEM((kk * Cin, HW), jnp.float32)],
        compiler_params=cparams,
    )(x, s1, b1, w1, masks)

    # bn2 statistics from the fused per-image partial sums (no HBM re-read).
    cnt2 = float(N * HW)
    m2 = jnp.sum(ssum, axis=0)[:, 0] / cnt2
    v2 = jnp.maximum(jnp.sum(ssq, axis=0)[:, 0] / cnt2 - m2 * m2, 0.0)
    s2, b2 = _fold_bn(params["bn2_gamma"], params["bn2_beta"], m2, v2)

    stage2 = _make_stage2_kernel(k=k, p=p, W=W, compute_dtype=compute_dtype,
                                 roll_np=roll_np, has_shortcut=not equal)
    if equal:
        out = pl.pallas_call(
            stage2,
            grid=(N,),
            in_specs=[h_spec, vec_spec(Cmid), vec_spec(Cmid), w2_spec, m_spec,
                      x_spec],
            out_specs=o_spec,
            out_shape=jax.ShapeDtypeStruct((N, Cout, HW), jnp.float32),
            scratch_shapes=[pltpu.VMEM((kk * Cmid, HW), jnp.float32)],
            compiler_params=cparams,
        )(h, s2, b2, w2, masks, x)
    else:
        wsc = params["sc_w"].reshape(Cout, Cin).astype(compute_dtype)
        out = pl.pallas_call(
            stage2,
            grid=(N,),
            in_specs=[h_spec, vec_spec(Cmid), vec_spec(Cmid), w2_spec, m_spec,
                      x_spec, vec_spec(Cin), vec_spec(Cin),
                      pl.BlockSpec((Cout, Cin), lambda n: (0, 0))],
            out_specs=o_spec,
            out_shape=jax.ShapeDtypeStruct((N, Cout, HW), jnp.float32),
            scratch_shapes=[pltpu.VMEM((kk * Cmid, HW), jnp.float32)],
            compiler_params=cparams,
        )(h, s2, b2, w2, masks, x, s1, b1, wsc)

    return out.reshape(N, Cout, H, W)


def block_forward(x_nchw, params, k, p, compute_dtype=jnp.bfloat16):
    """Public wrapper: NCHW in / NCHW out, matches the PyTorch Block forward."""
    return _block_forward_impl(x_nchw, params, k, p, compute_dtype,
                               _roll_matches_numpy())


# ----------------------------------------------------------------------------
# Pure-JAX reference (PyTorch Block semantics; conv_dtype controls the matmul
# operand dtype, h_store_dtype the storage dtype of the conv1 output -- with
# (f32, f32) this is the exact module forward, with (bf16, bf16) it matches
# the Pallas kernel's numerics up to summation order).
# ----------------------------------------------------------------------------
def _conv_ref(x, w, p, dtype):
    return jax.lax.conv_general_dilated(
        x.astype(dtype), w.astype(dtype), window_strides=(1, 1),
        padding=[(p, p), (p, p)],
        dimension_numbers=("NCHW", "OIHW", "NCHW"),
        preferred_element_type=jnp.float32,
        precision=jax.lax.Precision.HIGHEST)


@functools.partial(jax.jit, static_argnums=(2, 3, 4, 5))
def block_forward_ref(x, params, k, p, conv_dtype=jnp.float32,
                      h_store_dtype=jnp.float32):
    del k
    Cin = x.shape[1]
    Cout = params["conv2_w"].shape[0]
    equal = Cin == Cout

    def bn_fold(h, gamma, beta):
        m = jnp.mean(h, axis=(0, 2, 3))
        v = jnp.var(h, axis=(0, 2, 3))
        s = gamma / jnp.sqrt(v + EPS)
        t = beta - m * s
        return s[None, :, None, None], t[None, :, None, None]

    s1, t1 = bn_fold(x, params["bn1_gamma"], params["bn1_beta"])
    a1 = jnp.maximum(x * s1 + t1, 0.0)
    h = _conv_ref(a1, params["conv1_w"], p, conv_dtype)
    # bn2 stats from full-precision h; bn2 applied to the stored-precision h
    # (mirrors the kernel, which stores h in bf16 but keeps f32 statistics).
    s2, t2 = bn_fold(h, params["bn2_gamma"], params["bn2_beta"])
    hq = h.astype(h_store_dtype).astype(jnp.float32)
    a2 = jnp.maximum(hq * s2 + t2, 0.0)
    y = _conv_ref(a2, params["conv2_w"], p, conv_dtype)
    res = x if equal else _conv_ref(a1, params["sc_w"], 0, conv_dtype)
    return res + y


# ----------------------------------------------------------------------------
# Deterministic parameter init (synthetic; shapes match nn.Module.__init__)
# ----------------------------------------------------------------------------
def init_params(key, cin, cmid, cout, k):
    ks = jax.random.split(key, 7)
    params = {
        "bn1_gamma": 1.0 + 0.1 * jax.random.normal(ks[0], (cin,), jnp.float32),
        "bn1_beta": 0.1 * jax.random.normal(ks[1], (cin,), jnp.float32),
        "conv1_w": 0.1 * jax.random.normal(ks[2], (cmid, cin, k, k), jnp.float32),
        "bn2_gamma": 1.0 + 0.1 * jax.random.normal(ks[3], (cmid,), jnp.float32),
        "bn2_beta": 0.1 * jax.random.normal(ks[4], (cmid,), jnp.float32),
        "conv2_w": 0.1 * jax.random.normal(ks[5], (cout, cmid, k, k), jnp.float32),
    }
    if cin != cout:
        params["sc_w"] = 0.1 * jax.random.normal(ks[6], (cout, cin, 1, 1),
                                                 jnp.float32)
    return params


if __name__ == "__main__":
    key = jax.random.PRNGKey(0)
    N, H, W = 2, 16, 16
    k_sz, pad = 3, 1

    # (in_planes, mid_planes, out_planes): exercise both the shortcut-conv
    # branch (in != out) and the identity branch (in == out).
    configs = [(4, 8, 8), (8, 8, 8)]

    for (cin, cmid, cout) in configs:
        key, kx, kp = jax.random.split(key, 3)
        x = jax.random.normal(kx, (N, cin, H, W), jnp.float32)
        params = init_params(kp, cin, cmid, cout, k_sz)

        out = jax.block_until_ready(block_forward(x, params, k_sz, pad))
        assert out.shape == (N, cout, H, W), out.shape
        assert bool(jnp.all(jnp.isfinite(out)))

        # Tight structural check: reference with the same bf16 matmul operands
        # and bf16 h storage (f32 statistics/accumulation) -> only summation
        # order differs.
        ref_m = block_forward_ref(x, params, k_sz, pad,
                                  jnp.bfloat16, jnp.bfloat16)
        if not bool(jnp.allclose(out, ref_m, atol=5e-3, rtol=5e-3)):
            raise AssertionError(
                f"mismatch vs bf16-matched reference for {(cin, cmid, cout)}: "
                f"max err {float(jnp.max(jnp.abs(out - ref_m)))}")

        # Sanity check against the exact f32 module semantics (bf16 MXU inputs
        # + bf16 h storage are the only deviations of the Pallas path).
        ref_f = block_forward_ref(x, params, k_sz, pad,
                                  jnp.float32, jnp.float32)
        if not bool(jnp.allclose(out, ref_f, atol=7.5e-2, rtol=7.5e-2)):
            raise AssertionError(
                f"mismatch vs f32 reference for {(cin, cmid, cout)}: "
                f"max err {float(jnp.max(jnp.abs(out - ref_f)))}")

    print("KERNEL_OK")
</pallas_src>

<mosaic_0001>
module attributes {stable_mosaic.version = 11 : i64} {
  func.func @kern(%arg0: memref<8x128xf32, #tpu.memory_space<vmem>>, %arg1: memref<8x128xf32, #tpu.memory_space<vmem>>) attributes {dimension_semantics = [], scalar_prefetch = 0 : i64, scratch_operands = 0 : i64, tpu.core_type = #tpu.core_type<tc>} {
    %c0 = arith.constant 0 : index
    %c0_0 = arith.constant 0 : index
    %0 = vector.load %arg0[%c0, %c0_0] : memref<8x128xf32, #tpu.memory_space<vmem>>, vector<8x128xf32>
    %c1_i32 = arith.constant 1 : i32
    %1 = tpu.dynamic_rotate %0 by %c1_i32 dim 1 : vector<8x128xf32>, i32 -> vector<8x128xf32>
    %c0_1 = arith.constant 0 : index
    %c0_2 = arith.constant 0 : index
    %2 = vector.load %arg1[%c0_1, %c0_2] : memref<8x128xf32, #tpu.memory_space<vmem>>, vector<8x128xf32>
    tpu.vector_store %arg1[%c0_1, %c0_2], %1 {strides = array<i32>} : memref<8x128xf32, #tpu.memory_space<vmem>>, vector<8x128xf32>,
    return
  }
}

</mosaic_0001>

<llo_original>
// kernel: tpu_custom_call.1
$region0: #{tpu_custom_call.1}
  #allocation0 [shape = 'u32[]', space=smem, size = 0x4, offset = 0x4, fixed_abs, tag = 'smem constant byte address 0x4 - core index']
  #allocation1 [shape = 'u32[144,128]{1,0:T(1,128)}', space=vmem, size = 0x12000, scoped, tag = 'internal scratch']
  %s0 = inlined_call_operand.hbm [shape: f32[8,128], index: 0, kind: input, shape index: {}]
  %s1 = inlined_call_operand.hbm [shape: f32[8,128], index: 1, kind: output, shape index: {}]
  %s2 = sld [smem:[#allocation0]]
  $region18: #{tpu_custom_call.1} parent=0
    _
  %s4 = ssub.s32 1, %s2
  %s5 = scalar_select 0, %s4, %s2
  $region1: #{tpu_custom_call.1} parent=0
    #allocation2 [shape = 'u8[4096]{0}', space=vmem, size = 0x1000, scoped, tag = 'input window, operand 0, single buffered']
    #allocation3 [shape = 's32[1]{0}', space=sflag, size = 0x4, scoped, tag = 'scoped memory for tpu_custom_call.1']
    #allocation4 [shape = 's32[1]{0}', space=sflag, size = 0x4, scoped, tag = 'scoped memory for tpu_custom_call.1']
    #allocation5 [shape = 'u8[4096]{0}', space=vmem, size = 0x1000, scoped, tag = 'output window, operand 0, single buffered']
    %6 = vsyncpa [#allocation3], 0
    %7 = vsyncpa [#allocation4], 0
    // Predicated region
    $region2: #{tpu_custom_call.1} parent=1 // pred_check
      _
    $region3: #{tpu_custom_call.1} parent=1 // pred_check_branch
      %9 = sbr.rel (0) target = $region5
    $region4: #{tpu_custom_call.1} parent=1 // pred_region
      %s11 = ssub.s32 128, 128
      %12 = vsyncadd [#allocation3], %s11
      %s14 = sshll.u32 [#allocation2], 4
      %s15 = int_to_ptr.vmem [resolvable:$true] %s14
      %17 = dma.hbm_to_vmem [thread:$0]  %s0, 128, %s15, [#allocation3]
    $region5: #{tpu_custom_call.1} parent=1 // pred_fallthru
      _
    // Predicated region
    $region6: #{tpu_custom_call.1} parent=1 // pred_check
      _
    $region7: #{tpu_custom_call.1} parent=1 // pred_check_branch
      %19 = sbr.rel (0) target = $region9
    $region8: #{tpu_custom_call.1} parent=1 // pred_region
      %20 = dma.done [#allocation3], 128
    $region9: #{tpu_custom_call.1} parent=1 // pred_fallthru
      _
    %v21 = vld [vmem:[#allocation2] sm:$0xff]
    %22 = vrot.lane.b32.xlu0 %v21, 1
    %v23 = vpop.permute.xlu0 %22
    %24 = vst [vmem:[#allocation5] sm:$0xff] %v23
    // Predicated region
    $region10: #{tpu_custom_call.1} parent=1 // pred_check
      _
    $region11: #{tpu_custom_call.1} parent=1 // pred_check_branch
      %26 = sbr.rel (0) target = $region13
    $region12: #{tpu_custom_call.1} parent=1 // pred_region
      %s28 = ssub.s32 128, 128
      %29 = vsyncadd [#allocation4], %s28
      %s31 = sshll.u32 [#allocation5], 4
      %s32 = int_to_ptr.vmem [resolvable:$true] %s31
      %34 = dma.vmem_to_hbm [thread:$0]  %s32, 128, %s1, [#allocation4]
    $region13: #{tpu_custom_call.1} parent=1 // pred_fallthru
      _
    // Predicated region
    $region14: #{tpu_custom_call.1} parent=1 // pred_check
      _
    $region15: #{tpu_custom_call.1} parent=1 // pred_check_branch
      %36 = sbr.rel (0) target = $region17
    $region16: #{tpu_custom_call.1} parent=1 // pred_region
      %37 = dma.done [#allocation4], 128
    $region17: #{tpu_custom_call.1} parent=1 // pred_fallthru
      _
    %38 = vsyncpa [#allocation3], 1
    %39 = vsyncpa [#allocation4], 1

</llo_original>
